<compile_context>
chip_gen: v5e
topology: v5e:2x2
jax: 0.10.0
libtpu: 0.0.40
codegen_flags: <defaults>
</compile_context>

<pallas_src>
import jax
import jax.numpy as jnp
from jax.experimental import pallas as pl
from jax.experimental.pallas import tpu as pltpu


# ----------------------------------------------------------------------------
# Kernel: one (tm, tn) output tile, accumulated over the K grid axis.
# ----------------------------------------------------------------------------
def linear_act_kernel(x_ref, w_ref, b_ref, o_ref, acc_ref):
    # x_ref: (tm, tk)      w_ref: (tk, tn)   (weight already stored as [K, N])
    # b_ref: (1, tn) f32   o_ref: (tm, tn)   acc_ref: (tm, tn) f32 scratch
    k = pl.program_id(2)

    @pl.when(k == 0)
    def _():
        acc_ref[...] = jnp.zeros_like(acc_ref)

    acc_ref[...] += jnp.dot(x_ref[...], w_ref[...],
                            preferred_element_type=jnp.float32)

    @pl.when(k == pl.num_programs(2) - 1)
    def _():
        y = acc_ref[...] + b_ref[...]          # bias add in f32
        y = jnp.maximum(y, 0.0)                # activation_fn = ReLU
        o_ref[...] = y.astype(o_ref.dtype)


# ----------------------------------------------------------------------------
# Tiling helpers
# ----------------------------------------------------------------------------
def _round_up(x, m):
    return ((x + m - 1) // m) * m


def _pick_tile(dim, candidates):
    """Pick (from descending candidates) the tile minimizing padding of `dim`,
    preferring the larger tile on ties."""
    best, best_key = None, None
    for c in candidates:
        key = (_round_up(dim, c) - dim, -c)
        if best is None or key < best_key:
            best, best_key = c, key
    return best


def _tile_caps(compute_dtype):
    # (tm_cap, tn candidates, tk candidates); multiples of 128 (and mostly of
    # 256 for the v6e 2x256x256 MXU).
    if jnp.dtype(compute_dtype).itemsize <= 2:
        return 512, (1024, 512, 256, 128), (2048, 1024, 512, 256, 128)
    return 256, (1024, 512, 256, 128), (1024, 512, 256, 128)


# ----------------------------------------------------------------------------
# One-time parameter preparation (kept OUT of the per-call path).
# ----------------------------------------------------------------------------
def prepare_linear_params(weight, bias, *, compute_dtype=jnp.bfloat16,
                          tn=None, tk=None):
    """weight: [N, K] (PyTorch nn.Linear layout), bias: [N].

    Returns params with the weight transposed to [K, N], cast to the compute
    dtype and padded to (tk, tn) multiples, plus an f32 [1, Np] bias row."""
    N, K = weight.shape
    _, tn_cands, tk_cands = _tile_caps(compute_dtype)
    if tn is None:
        tn = _pick_tile(N, tn_cands)
    if tk is None:
        tk = K if K <= 128 else _pick_tile(K, tk_cands)
    Np = _round_up(N, tn)
    Kp = _round_up(K, tk)

    w_kn = weight.T.astype(compute_dtype)            # one-time transpose + cast
    if (Kp, Np) != w_kn.shape:
        w_kn = jnp.pad(w_kn, ((0, Kp - K), (0, Np - N)))
    b = bias.astype(jnp.float32)
    if Np != N:
        b = jnp.pad(b, (0, Np - N))
    b2d = b.reshape(1, Np)

    return dict(w_kn=w_kn, b2d=b2d, N=N, K=K, tn=tn, tk=tk,
                compute_dtype=jnp.dtype(compute_dtype))


# ----------------------------------------------------------------------------
# Forward: ReLU(x @ W.T + b)
# ----------------------------------------------------------------------------
def layer_test_forward(x, params, *, tm=None):
    """x: [B, K]; params from prepare_linear_params.  Returns [B, N]."""
    B, K = x.shape
    assert K == params["K"], (K, params["K"])
    w_kn, b2d = params["w_kn"], params["b2d"]
    tn, tk = params["tn"], params["tk"]
    compute_dtype = params["compute_dtype"]
    Kp, Np = w_kn.shape
    N = params["N"]
    out_dtype = x.dtype

    tm_cap, _, _ = _tile_caps(compute_dtype)
    if tm is None:
        tm = B if B <= tm_cap else tm_cap          # whole batch for small B
    Bp = _round_up(B, tm)

    # v7x megacore: keep at least 2 parallel (i, j) tiles when possible so both
    # TensorCores get work (neutral on single-TC v5e/v6e).
    while (Bp // tm) * (Np // tn) < 2 and tn >= 256:
        tn //= 2

    grid = (Bp // tm, Np // tn, Kp // tk)
    n_steps = grid[0] * grid[1] * grid[2]

    # Only the activations are cast/padded per call (cheap); weight/bias were
    # prepared once.
    x_c = x if x.dtype == compute_dtype else x.astype(compute_dtype)
    if (Bp, Kp) != x_c.shape:
        x_c = jnp.pad(x_c, ((0, Bp - B), (0, Kp - K)))

    # Small-batch / weight-streaming regime: deepen the weight pipeline.
    deep_weight_pipe = (grid[0] == 1 and n_steps >= 3)
    if deep_weight_pipe:
        w_spec = pl.BlockSpec((tk, tn), lambda i, j, k: (k, j),
                              pipeline_mode=pl.Buffered(3))
    else:
        w_spec = pl.BlockSpec((tk, tn), lambda i, j, k: (k, j))

    cbytes = jnp.dtype(compute_dtype).itemsize
    obytes = jnp.dtype(out_dtype).itemsize
    w_bufs = 3 if deep_weight_pipe else 2

    # Double-buffered working set -> explicit VMEM limit (v5e scoped default is
    # only 16 MiB; cap below v7x's 64 MiB physical per TC).
    working = (2 * tm * tk * cbytes            # x tiles
               + w_bufs * tk * tn * cbytes     # weight tiles
               + 2 * tn * 4                    # bias tiles (f32)
               + 2 * tm * tn * obytes          # output tiles
               + tm * tn * 4)                  # f32 accumulator
    vmem_limit = int(min(max(2 * working, 32 * 1024 * 1024), 56 * 1024 * 1024))

    grid_spec = pltpu.PrefetchScalarGridSpec(
        num_scalar_prefetch=0,
        grid=grid,
        in_specs=[
            pl.BlockSpec((tm, tk), lambda i, j, k: (i, k)),   # x tile
            w_spec,                                           # weight tile [K, N]
            pl.BlockSpec((1, tn), lambda i, j, k: (0, j)),    # bias tile
        ],
        out_specs=pl.BlockSpec((tm, tn), lambda i, j, k: (i, j)),
        scratch_shapes=[pltpu.VMEM((tm, tn), jnp.float32)],
    )

    # Padded shapes + weight re-streaming across batch tiles.
    cost = pl.CostEstimate(
        flops=2 * Bp * Kp * Np,
        transcendentals=0,
        bytes_accessed=int((Bp * Kp * (Np // tn) + Kp * Np * (Bp // tm)) * cbytes
                           + Np * 4 + Bp * Np * obytes),
    )

    out = pl.pallas_call(
        linear_act_kernel,
        out_shape=jax.ShapeDtypeStruct((Bp, Np), out_dtype),
        grid_spec=grid_spec,
        compiler_params=pltpu.CompilerParams(
            dimension_semantics=("parallel", "parallel", "arbitrary"),
            vmem_limit_bytes=vmem_limit,
        ),
        cost_estimate=cost,
    )(x_c, w_kn, b2d)

    if (Bp, Np) != (B, N):
        out = out[:B, :N]
    return out


# ----------------------------------------------------------------------------
# Demo / correctness checks
# ----------------------------------------------------------------------------
if __name__ == "__main__":
    key = jax.random.PRNGKey(0)
    kx, kw, kb = jax.random.split(key, 3)

    batch, input_size, output_size = 8, 32, 128
    x = jax.random.normal(kx, (batch, input_size), dtype=jnp.float32)
    bound = 1.0 / (input_size ** 0.5)
    weight = jax.random.uniform(kw, (output_size, input_size),
                                minval=-bound, maxval=bound, dtype=jnp.float32)
    bias = jax.random.uniform(kb, (output_size,),
                              minval=-bound, maxval=bound, dtype=jnp.float32)

    ref = jnp.maximum(x @ weight.T + bias, 0.0)

    # 1) f32 compute path (single-step grid at these shapes).
    p_f32 = prepare_linear_params(weight, bias, compute_dtype=jnp.float32)
    out_f32 = jax.block_until_ready(layer_test_forward(x, p_f32))
    assert out_f32.shape == (batch, output_size)
    assert jnp.allclose(out_f32, ref, atol=2e-2, rtol=2e-2)

    # 2) default production path: bf16 weights/activations, f32 accumulate.
    p_bf16 = prepare_linear_params(weight, bias)           # bf16 by default
    out_bf16 = jax.block_until_ready(layer_test_forward(x, p_bf16))
    assert out_bf16.shape == (batch, output_size)
    assert out_bf16.dtype == x.dtype
    assert jnp.allclose(out_bf16, ref, atol=5e-2, rtol=5e-2)

    # 3) multi-tile grid (still small): exercises the K accumulator, N tiling,
    #    and the Buffered(3) weight pipeline.
    k2 = jax.random.PRNGKey(1)
    kx2, kw2, kb2 = jax.random.split(k2, 3)
    b2, in2, out2 = 16, 256, 384
    x2 = jax.random.normal(kx2, (b2, in2), dtype=jnp.float32)
    w2 = jax.random.normal(kw2, (out2, in2), dtype=jnp.float32) * 0.05
    bz2 = jax.random.normal(kb2, (out2,), dtype=jnp.float32) * 0.05
    ref2 = jnp.maximum(x2 @ w2.T + bz2, 0.0)
    p2 = prepare_linear_params(w2, bz2, compute_dtype=jnp.float32, tk=128)
    y2 = jax.block_until_ready(layer_test_forward(x2, p2))
    assert y2.shape == (b2, out2)
    assert jnp.allclose(y2, ref2, atol=2e-2, rtol=2e-2)

    print("KERNEL_OK")
</pallas_src>

<mosaic_0001>
module attributes {stable_mosaic.version = 11 : i64} {
  func.func @linear_act_kernel(%arg0: i32, %arg1: i32, %arg2: i32, %arg3: memref<8x32xf32, #tpu.memory_space<vmem>>, %arg4: memref<32x128xf32, #tpu.memory_space<vmem>>, %arg5: memref<1x128xf32, #tpu.memory_space<vmem>>, %arg6: memref<8x128xf32, #tpu.memory_space<vmem>>, %arg7: memref<8x128xf32, #tpu.memory_space<vmem>>) attributes {dimension_semantics = [#tpu.dimension_semantics<parallel>, #tpu.dimension_semantics<parallel>, #tpu.dimension_semantics<arbitrary>], iteration_bounds = array<i64: 1, 1, 1>, scalar_prefetch = 0 : i64, scratch_operands = 1 : i64, tpu.core_type = #tpu.core_type<tc>, window_params = [{transform_indices = @transform_0, window_bounds = array<i64: 8, 32>}, {transform_indices = @transform_1, window_bounds = array<i64: 32, 128>}, {transform_indices = @transform_2, window_bounds = array<i64: 1, 128>}, {transform_indices = @transform_3, window_bounds = array<i64: 8, 128>}]} {
    %c0_i32 = arith.constant 0 : i32
    %0 = arith.cmpi eq, %arg2, %c0_i32 : i32
    %1 = arith.extui %0 : i1 to i32
    %c0_i32_0 = arith.constant 0 : i32
    %2 = arith.cmpi ne, %1, %c0_i32_0 : i32
    scf.if %2 {
      %cst_10 = arith.constant 0.000000e+00 : f32
      %12 = vector.broadcast %cst_10 : f32 to vector<8x128xf32>
      %c0_11 = arith.constant 0 : index
      %c0_12 = arith.constant 0 : index
      %13 = vector.load %arg7[%c0_11, %c0_12] : memref<8x128xf32, #tpu.memory_space<vmem>>, vector<8x128xf32>
      tpu.vector_store %arg7[%c0_11, %c0_12], %12 {strides = array<i32>} : memref<8x128xf32, #tpu.memory_space<vmem>>, vector<8x128xf32>,
    } else {
    }
    %c0 = arith.constant 0 : index
    %c0_1 = arith.constant 0 : index
    %3 = vector.load %arg7[%c0, %c0_1] : memref<8x128xf32, #tpu.memory_space<vmem>>, vector<8x128xf32>
    %c0_2 = arith.constant 0 : index
    %c0_3 = arith.constant 0 : index
    %4 = vector.load %arg3[%c0_2, %c0_3] : memref<8x32xf32, #tpu.memory_space<vmem>>, vector<8x32xf32>
    %c0_4 = arith.constant 0 : index
    %c0_5 = arith.constant 0 : index
    %5 = vector.load %arg4[%c0_4, %c0_5] : memref<32x128xf32, #tpu.memory_space<vmem>>, vector<32x128xf32>
    %cst = arith.constant dense<0.000000e+00> : vector<8x128xf32>
    %6 = tpu.matmul %4, %5, %cst {dimension_numbers = #tpu.dot_dimension_numbers<[1], [0], [0], [1], [0, 0, 1, 1], [], []>} : vector<8x32xf32>, vector<32x128xf32>, vector<8x128xf32> -> vector<8x128xf32>
    %7 = arith.addf %3, %6 : vector<8x128xf32>
    %c0_6 = arith.constant 0 : index
    %c0_7 = arith.constant 0 : index
    %8 = vector.load %arg7[%c0_6, %c0_7] : memref<8x128xf32, #tpu.memory_space<vmem>>, vector<8x128xf32>
    tpu.vector_store %arg7[%c0_6, %c0_7], %7 {strides = array<i32>} : memref<8x128xf32, #tpu.memory_space<vmem>>, vector<8x128xf32>,
    %c0_i32_8 = arith.constant 0 : i32
    %9 = arith.cmpi eq, %arg2, %c0_i32_8 : i32
    %10 = arith.extui %9 : i1 to i32
    %c0_i32_9 = arith.constant 0 : i32
    %11 = arith.cmpi ne, %10, %c0_i32_9 : i32
    scf.if %11 {
      %c0_10 = arith.constant 0 : index
      %c0_11 = arith.constant 0 : index
      %12 = vector.load %arg7[%c0_10, %c0_11] : memref<8x128xf32, #tpu.memory_space<vmem>>, vector<8x128xf32>
      %c0_12 = arith.constant 0 : index
      %c0_13 = arith.constant 0 : index
      %13 = vector.load %arg5[%c0_12, %c0_13] : memref<1x128xf32, #tpu.memory_space<vmem>>, vector<1x128xf32>
      %14 = vector.broadcast %13 : vector<1x128xf32> to vector<8x128xf32>
      %15 = arith.addf %12, %14 : vector<8x128xf32>
      %cst_14 = arith.constant 0.000000e+00 : f32
      %16 = vector.broadcast %cst_14 : f32 to vector<8x128xf32>
      %17 = arith.maximumf %15, %16 : vector<8x128xf32>
      %c0_15 = arith.constant 0 : index
      %c0_16 = arith.constant 0 : index
      %18 = vector.load %arg6[%c0_15, %c0_16] : memref<8x128xf32, #tpu.memory_space<vmem>>, vector<8x128xf32>
      tpu.vector_store %arg6[%c0_15, %c0_16], %17 {strides = array<i32>} : memref<8x128xf32, #tpu.memory_space<vmem>>, vector<8x128xf32>,
    } else {
    }
    return
  }
  func.func @transform_0(%arg0: i32, %arg1: i32, %arg2: i32) -> (i32, i32) {
    %c0_i32 = arith.constant 0 : i32
    return %arg0, %arg2 : i32, i32
  }
  func.func @transform_1(%arg0: i32, %arg1: i32, %arg2: i32) -> (i32, i32) {
    %c0_i32 = arith.constant 0 : i32
    return %arg2, %arg1 : i32, i32
  }
  func.func @transform_2(%arg0: i32, %arg1: i32, %arg2: i32) -> (i32, i32) {
    %c0_i32 = arith.constant 0 : i32
    %c0_i32_0 = arith.constant 0 : i32
    return %c0_i32, %arg1 : i32, i32
  }
  func.func @transform_3(%arg0: i32, %arg1: i32, %arg2: i32) -> (i32, i32) {
    %c0_i32 = arith.constant 0 : i32
    return %arg0, %arg1 : i32, i32
  }
}

</mosaic_0001>

<llo_original>
// kernel: tpu_custom_call.1
$region0: #{tpu_custom_call.1}
  #allocation0 [shape = 'u32[]', space=smem, size = 0x4, offset = 0x4, fixed_abs, tag = 'smem constant byte address 0x4 - core index']
  #allocation1 [shape = 'u32[72,128]{1,0:T(1,128)}', space=vmem, size = 0x9000, scoped, tag = 'internal scratch']
  #allocation2 [shape = 'f32[8,128]{1,0:T(8,128)}', space=vmem, size = 0x1000, scoped, tag = 'scratch operand']
  %s0 = inlined_call_operand.hbm [shape: f32[8,32], index: 0, kind: input, shape index: {}]
  %s1 = inlined_call_operand.hbm [shape: f32[32,128], index: 1, kind: input, shape index: {}]
  %s2 = inlined_call_operand.vmem [shape: f32[1,128], index: 2, kind: input, shape index: {}]
  %s3 = inlined_call_operand.hbm [shape: f32[8,128], index: 3, kind: output, shape index: {}]
  %s4 = sld [smem:[#allocation0]]
  $region38: #{tpu_custom_call.1} parent=0
    _
  %s6 = ssub.s32 1, %s4
  %s7 = scalar_select 0, %s6, %s4
  $region1: #{tpu_custom_call.1} parent=0
    #allocation3 [shape = 'u8[4096]{0}', space=vmem, size = 0x1000, scoped, tag = 'input window, operand 0, single buffered']
    #allocation4 [shape = 's32[1]{0}', space=sflag, size = 0x4, scoped, tag = 'scoped memory for tpu_custom_call.1']
    #allocation5 [shape = 's32[1]{0}', space=sflag, size = 0x4, scoped, tag = 'scoped memory for tpu_custom_call.1']
    #allocation6 [shape = 'u8[16384]{0}', space=vmem, size = 0x4000, scoped, tag = 'input window, operand 1, single buffered']
    #allocation7 [shape = 's32[1]{0}', space=sflag, size = 0x4, scoped, tag = 'scoped memory for tpu_custom_call.1']
    #allocation8 [shape = 'u8[4096]{0}', space=vmem, size = 0x1000, scoped, tag = 'output window, operand 0, single buffered']
    %8 = vsyncpa [#allocation4], 0
    %9 = vsyncpa [#allocation7], 0
    %10 = vsyncpa [#allocation5], 0
    // Predicated region
    $region2: #{tpu_custom_call.1} parent=1 // pred_check
      _
    $region3: #{tpu_custom_call.1} parent=1 // pred_check_branch
      %12 = sbr.rel (0) target = $region5
    $region4: #{tpu_custom_call.1} parent=1 // pred_region
      %14 = vsyncadd [#allocation4], 0
      %s16 = sshll.u32 %s0, 4
      %s17 = int_to_ptr.hbm [resolvable:$true] %s16
      %s18 = sshll.u32 [#allocation3], 4
      %s19 = int_to_ptr.vmem [resolvable:$true] %s18
      %21 = dma.hbm_to_vmem [thread:$0]  %s17, 128, %s19, [#allocation4]
    $region5: #{tpu_custom_call.1} parent=1 // pred_fallthru
      _
    // Predicated region
    $region6: #{tpu_custom_call.1} parent=1 // pred_check
      _
    $region7: #{tpu_custom_call.1} parent=1 // pred_check_branch
      %23 = sbr.rel (0) target = $region9
    $region8: #{tpu_custom_call.1} parent=1 // pred_region
      %25 = vsyncadd [#allocation7], 0
      %s26 = sshll.u32 %s1, 4
      %s27 = int_to_ptr.hbm [resolvable:$true] %s26
      %s28 = sshll.u32 [#allocation6], 4
      %s29 = int_to_ptr.vmem [resolvable:$true] %s28
      %34 = dma.hbm_to_vmem [thread:$0]  %s27, 512, %s29, [#allocation7], 128, 128, 8
    $region9: #{tpu_custom_call.1} parent=1 // pred_fallthru
      _
    // Predicated region
    $region10: #{tpu_custom_call.1} parent=1 // pred_check
      _
    $region11: #{tpu_custom_call.1} parent=1 // pred_check_branch
      %36 = sbr.rel (0) target = $region13
    $region12: #{tpu_custom_call.1} parent=1 // pred_region
      _
    $region13: #{tpu_custom_call.1} parent=1 // pred_fallthru
      _
    // Predicated region
    $region14: #{tpu_custom_call.1} parent=1 // pred_check
      _
    $region15: #{tpu_custom_call.1} parent=1 // pred_check_branch
      %38 = sbr.rel (0) target = $region17
    $region16: #{tpu_custom_call.1} parent=1 // pred_region
      %40 = dma.done [#allocation4], 128
    $region17: #{tpu_custom_call.1} parent=1 // pred_fallthru
      _
    // Predicated region
    $region18: #{tpu_custom_call.1} parent=1 // pred_check
      _
    $region19: #{tpu_custom_call.1} parent=1 // pred_check_branch
      %42 = sbr.rel (0) target = $region21
    $region20: #{tpu_custom_call.1} parent=1 // pred_region
      %44 = dma.done [#allocation7], 512
    $region21: #{tpu_custom_call.1} parent=1 // pred_fallthru
      _
    %p45 = scmp.eq.s32.totalorder 0, 0
    // Predicated region
    $region22: #{tpu_custom_call.1} parent=1 // pred_check
      %p46 = pneg %p45
    $region23: #{tpu_custom_call.1} parent=1 // pred_check_branch
      %48 = sbr.rel (%p46) target = $region25
    $region24: #{tpu_custom_call.1} parent=1 // pred_region
      %49 = vst [vmem:[#allocation2] sm:$0xff] 0.0
    $region25: #{tpu_custom_call.1} parent=1 // pred_fallthru
      _
    %v50 = vld [vmem:[#allocation2] sm:$0xff]
    %v51 = vld [vmem:[#allocation3] sm:$0xff]
    %v52 = vld [vmem:[#allocation6] sm:$0xff]
    %v53 = vld [vmem:[#allocation6 + $0x8] sm:$0xff]
    %v54 = vld [vmem:[#allocation6 + $0x10] sm:$0xff]
    %v55 = vld [vmem:[#allocation6 + $0x18] sm:$0xff]
    %vm56 = vcmask 261120
    %v58 = vsel %vm56, %v51, 0
    %60 = vmatpush.msra.mxu0 0.0
    %61 = vmatpush.msra.mxu0 0.0
    %62 = vmatpush.msra.mxu0 0.0
    %63 = vmatpush.msra.mxu0 0.0
    %64 = vmatpush.msra.mxu0 0.0
    %65 = vmatpush.msra.mxu0 0.0
    %66 = vmatpush.msra.mxu0 0.0
    %67 = vmatpush.msra.mxu0 0.0
    %68 = vmatpush.msra.mxu0 0.0
    %69 = vmatpush.msra.mxu0 0.0
    %70 = vmatpush.msra.mxu0 0.0
    %71 = vmatpush.msra.mxu0 0.0
    %72 = vmatpush.msra.mxu0 %v55
    %73 = vmatpush.msra.mxu0 %v54
    %74 = vmatpush.msra.mxu0 %v53
    %75 = vmatpush.msra.mxu0 %v52
    %76 = vmatmul.f32.gmra.mxu0 %v58
    %v77 = vpop.f32.mrf.mxu0
    %v78 = vadd.f32 0.0, %v77
    %79 = vdwg.mxu0
    %v80 = vadd.f32 %v50, %v78
    %81 = vst [vmem:[#allocation2] sm:$0xff] %v80
    // Predicated region
    $region26: #{tpu_custom_call.1} parent=1 // pred_check
      %p82 = pneg %p45
    $region27: #{tpu_custom_call.1} parent=1 // pred_check_branch
      %84 = sbr.rel (%p82) target = $region29
    $region28: #{tpu_custom_call.1} parent=1 // pred_region
      %v85 = vld [vmem:[#allocation2] sm:$0xff]
      %v86 = vld [vmem:[%s2] sm:$0x1]
      %v88 = vperm.slane %v86, 0
      %v90 = vadd.f32 %v85, %v88
      %v91 = vmax.f32 %v90, 0.0
      %92 = vst [vmem:[#allocation8] sm:$0xff] %v91
    $region29: #{tpu_custom_call.1} parent=1 // pred_fallthru
      _
    // Predicated region
    $region30: #{tpu_custom_call.1} parent=1 // pred_check
      _
    $region31: #{tpu_custom_call.1} parent=1 // pred_check_branch
      %94 = sbr.rel (0) target = $region33
    $region32: #{tpu_custom_call.1} parent=1 // pred_region
      %96 = vsyncadd [#allocation5], 0
      %s98 = sshll.u32 [#allocation8], 4
      %s99 = int_to_ptr.vmem [resolvable:$true] %s98
      %s100 = sshll.u32 %s3, 4
      %s101 = int_to_ptr.hbm [resolvable:$true] %s100
      %103 = dma.vmem_to_hbm [thread:$0]  %s99, 128, %s101, [#allocation5]
    $region33: #{tpu_custom_call.1} parent=1 // pred_fallthru
      _
    // Predicated region
    $region34: #{tpu_custom_call.1} parent=1 // pred_check
      _
    $region35: #{tpu_custom_call.1} parent=1 // pred_check_branch
      %105 = sbr.rel (0) target = $region37
    $region36: #{tpu_custom_call.1} parent=1 // pred_region
      %107 = dma.done [#allocation5], 128
    $region37: #{tpu_custom_call.1} parent=1 // pred_fallthru
      _
    %108 = vsyncpa [#allocation4], 1
    %109 = vsyncpa [#allocation7], 1
    %110 = vsyncpa [#allocation5], 1

</llo_original>
